<compile_context>
chip_gen: v7x
topology: tpu7x:2x2x1
jax: 0.10.0
libtpu: 0.0.40
codegen_flags: <defaults>
</compile_context>

<pallas_src>
import functools
import math

import jax
import jax.numpy as jnp
from jax import lax
from jax.experimental import pallas as pl
from jax.experimental.pallas import tpu as pltpu

DTYPE = jnp.bfloat16          # activation / weight streaming dtype (MXU native)


def _pad_to(x, m):
    return ((x + m - 1) // m) * m


def _choose_tile(dp, candidates=(512, 256, 128)):
    for c in candidates:
        if dp % c == 0:
            return c
    return dp


def _choose_m_tile(M):
    """Return (TM, Mp): adapt the M tile to the true M (M=2..96 in fusion)."""
    Mp8 = _pad_to(M, 8)
    if Mp8 <= 512:                 # single M tile, no wasted MXU rows
        return Mp8, Mp8
    for tm in (256, 128):
        if Mp8 % tm == 0:
            return tm, Mp8
    return 128, _pad_to(M, 128)


def _choose_div(d, candidates):
    for c in candidates:
        if d % c == 0:
            return c
    return d


# ----------------------------------------------------------------------------
# Pallas kernels
# ----------------------------------------------------------------------------
def _matmul_kernel(a_ref, b_ref, s_ref, t_ref, o_ref, acc_ref, *, act):
    @pl.when(pl.program_id(2) == 0)
    def _():
        acc_ref[...] = jnp.zeros_like(acc_ref)

    acc_ref[...] += jnp.dot(a_ref[...], b_ref[...],
                            preferred_element_type=jnp.float32)

    @pl.when(pl.program_id(2) == pl.num_programs(2) - 1)
    def _():
        y = acc_ref[...] * s_ref[...] + t_ref[...]      # f32 epilogue
        if act == "relu":
            y = jnp.maximum(y, 0.0)
        elif act == "sigmoid":
            y = jax.nn.sigmoid(y)
        o_ref[...] = y.astype(o_ref.dtype)


@functools.lru_cache(maxsize=None)
def _build_matmul(Mp, Kp, Np, TM, TK, TN, act):
    grid = (Mp // TM, Np // TN, Kp // TK)
    cost = pl.CostEstimate(
        flops=2 * Mp * Kp * Np,
        transcendentals=(Mp * Np if act == "sigmoid" else 0),
        bytes_accessed=(Mp * Kp + Kp * Np + Mp * Np) * 2)
    return pl.pallas_call(
        functools.partial(_matmul_kernel, act=act),
        out_shape=jax.ShapeDtypeStruct((Mp, Np), DTYPE),
        grid_spec=pltpu.PrefetchScalarGridSpec(
            num_scalar_prefetch=0,
            grid=grid,
            in_specs=[
                pl.BlockSpec((TM, TK), lambda i, j, k: (i, k)),
                pl.BlockSpec((TK, TN), lambda i, j, k: (k, j)),
                pl.BlockSpec((1, TN), lambda i, j, k: (0, j)),
                pl.BlockSpec((1, TN), lambda i, j, k: (0, j)),
            ],
            out_specs=pl.BlockSpec((TM, TN), lambda i, j, k: (i, j)),
            scratch_shapes=[pltpu.VMEM((TM, TN), jnp.float32)],
        ),
        compiler_params=pltpu.CompilerParams(
            dimension_semantics=("parallel", "parallel", "arbitrary")),
        cost_estimate=cost,
    )


def pallas_matmul_packed(a, p):
    """act((a @ W)*scale+shift) with pre-packed/padded bf16 weight W."""
    M, K = a.shape
    Kp, Np, TK, TN = p["Kp"], p["Np"], p["TK"], p["TN"]
    TM, Mp = _choose_m_tile(M)
    a = a.astype(DTYPE)
    if (Mp, Kp) != (M, K):
        a = jnp.pad(a, ((0, Mp - M), (0, Kp - K)))
    fn = _build_matmul(Mp, Kp, Np, TM, TK, TN, p["act"])
    out = fn(a, p["w"], p["s"], p["t"])
    return out[:M, :p["N"]]


def _gate_kernel(a_ref, x_ref, o_ref):
    a = a_ref[...].astype(jnp.float32)
    x = x_ref[...].astype(jnp.float32)
    o_ref[...] = (jax.nn.sigmoid(a) * x).astype(o_ref.dtype)


@functools.lru_cache(maxsize=None)
def _build_gate(B, S, C, TS, TC, spatial):
    if spatial:                    # att: (B,S,1) broadcast over channels
        a_spec = pl.BlockSpec((1, TS, 1), lambda b, i, j: (b, i, 0))
    else:                          # att: (B,1,C) broadcast over spatial
        a_spec = pl.BlockSpec((1, 1, TC), lambda b, i, j: (b, 0, j))
    x_spec = pl.BlockSpec((1, TS, TC), lambda b, i, j: (b, i, j))
    return pl.pallas_call(
        _gate_kernel,
        out_shape=jax.ShapeDtypeStruct((B, S, C), DTYPE),
        grid_spec=pltpu.PrefetchScalarGridSpec(
            num_scalar_prefetch=0,
            grid=(B, S // TS, C // TC),
            in_specs=[a_spec, x_spec],
            out_specs=x_spec),
        compiler_params=pltpu.CompilerParams(
            dimension_semantics=("parallel", "parallel", "parallel")),
    )


def pallas_sigmoid_gate(att, x):
    """out = sigmoid(att) * x.  NHWC.  att is (B,H,W,1) or (B,1,1,C)."""
    B, H, W, C = x.shape
    S = H * W
    TS = _choose_div(S, (2048, 1024, 512, 256, 128))
    TC = _choose_div(C, (512, 256, 128))
    spatial = att.shape[-1] == 1
    a3 = att.reshape(B, S, 1) if spatial else att.reshape(B, 1, C)
    x3 = x.reshape(B, S, C).astype(DTYPE)
    fn = _build_gate(B, S, C, TS, TC, spatial)
    out = fn(a3.astype(DTYPE), x3)
    return out.reshape(B, H, W, C)


# ----------------------------------------------------------------------------
# Conv2d = NHWC im2col (glue) + Pallas matmul (hot path)
# ----------------------------------------------------------------------------
def pack_conv(w, b, bn, *, act, stride, padding):
    """Pre-pack a Conv2d once: (K,N) bf16 weight, folded BN scale/shift."""
    O, I, kh, kw = w.shape
    K, N = kh * kw * I, O
    w2 = jnp.transpose(w, (2, 3, 1, 0)).reshape(K, N)
    Kp, Np = _pad_to(K, 128), _pad_to(N, 128)
    w_p = jnp.zeros((Kp, Np), DTYPE).at[:K, :N].set(w2.astype(DTYPE))
    bias = b if b is not None else jnp.zeros((N,), jnp.float32)
    if bn is not None:
        gamma, beta, mean, var, eps = bn
        s = gamma / jnp.sqrt(var + eps)
        t = (bias - mean) * s + beta
    else:
        s = jnp.ones((N,), jnp.float32)
        t = bias
    s_p = jnp.zeros((1, Np), jnp.float32).at[0, :N].set(s)
    t_p = jnp.zeros((1, Np), jnp.float32).at[0, :N].set(t)
    return {"w": w_p, "s": s_p, "t": t_p, "K": K, "N": N, "Kp": Kp, "Np": Np,
            "TK": _choose_tile(Kp), "TN": _choose_tile(Np),
            "kh": kh, "kw": kw, "stride": stride, "pad": padding, "act": act}


def conv_apply(p, x):
    """x: NHWC bf16 -> NHWC bf16."""
    B, H, W, C = x.shape
    kh, kw, st, pad = p["kh"], p["kw"], p["stride"], p["pad"]
    if pad:
        x = jnp.pad(x, ((0, 0), (pad, pad), (pad, pad), (0, 0)))
    Hp, Wp = x.shape[1], x.shape[2]
    Ho = (Hp - kh) // st + 1
    Wo = (Wp - kw) // st + 1
    if kh == 1 and kw == 1 and st == 1:
        patches = x.reshape(B * Ho * Wo, C)        # pure view, no duplication
    else:
        # TODO(synk): im2col still materializes kh*kw shifted copies in HBM;
        # folding the tap loop into the matmul grid (manual DMA) would cut it.
        cols = [x[:, i:i + st * Ho:st, j:j + st * Wo:st, :]
                for i in range(kh) for j in range(kw)]
        patches = jnp.concatenate(cols, axis=-1).reshape(B * Ho * Wo,
                                                         kh * kw * C)
    y = pallas_matmul_packed(patches, p)
    return y.reshape(B, Ho, Wo, p["N"])


def seq_apply(blocks, x):
    for p in blocks:
        x = conv_apply(p, x)
    return x


# ----------------------------------------------------------------------------
# Small helpers (plain-JAX glue: reductions, resizing, BN prelude) — NHWC
# ----------------------------------------------------------------------------
def bn_relu(x, bn):
    gamma, beta, mean, var, eps = bn
    s = gamma * lax.rsqrt(var + eps)
    t = beta - mean * s
    y = x.astype(jnp.float32) * s + t
    return jnp.maximum(y, 0.0).astype(x.dtype)


def maxpool_3x3_s2(x):
    return lax.reduce_window(x, jnp.array(-jnp.inf, x.dtype), lax.max,
                             (1, 3, 3, 1), (1, 2, 2, 1),
                             ((0, 0), (1, 1), (1, 1), (0, 0)))


def _interp_mat(n_in, n_out):
    if n_in == 1:
        return jnp.ones((n_out, 1), jnp.float32)
    pos = jnp.arange(n_out, dtype=jnp.float32) * (n_in - 1) / (n_out - 1)
    lo = jnp.clip(jnp.floor(pos).astype(jnp.int32), 0, n_in - 2)
    frac = pos - lo.astype(jnp.float32)
    m = jnp.zeros((n_out, n_in), jnp.float32)
    m = m.at[jnp.arange(n_out), lo].add(1.0 - frac)
    m = m.at[jnp.arange(n_out), lo + 1].add(frac)
    return m


def bilinear_resize(x, out_h, out_w):   # align_corners=True, NHWC, returns f32
    Mh = _interp_mat(x.shape[1], out_h)
    Mw = _interp_mat(x.shape[2], out_w)
    return jnp.einsum('oh,bhwc,pw->bopc', Mh, x.astype(jnp.float32), Mw)


# ----------------------------------------------------------------------------
# Deterministic parameter factory
# ----------------------------------------------------------------------------
class ParamFactory:
    def __init__(self, seed=0):
        self.key = jax.random.PRNGKey(seed)

    def _next(self):
        self.key, k = jax.random.split(self.key)
        return k

    def conv(self, out_ch, in_ch, kh, kw, bias=True):
        fan_in = in_ch * kh * kw
        w = jax.random.normal(self._next(), (out_ch, in_ch, kh, kw),
                              jnp.float32) * math.sqrt(2.0 / fan_in)
        b = None
        if bias:
            bound = 1.0 / math.sqrt(fan_in)
            b = jax.random.uniform(self._next(), (out_ch,), jnp.float32,
                                   -bound, bound)
        return {"w": w, "b": b}

    def bn(self, ch):
        return (jnp.ones((ch,), jnp.float32), jnp.zeros((ch,), jnp.float32),
                jnp.zeros((ch,), jnp.float32), jnp.ones((ch,), jnp.float32),
                1e-5)


def make_pconv(pf, inp, out, k=3, stride=1, padding=None, bn=False,
               act="none", bias=True):
    if padding is None:
        padding = (k - 1) // 2
    c = pf.conv(out, inp, k, k, bias=bias)
    bn_p = pf.bn(out) if bn else None
    return pack_conv(c["w"], c["b"], bn_p, act=act, stride=stride,
                     padding=padding)


def make_conv(pf, inp, out, k=3, bn=False, relu=True, bias=True):
    return make_pconv(pf, inp, out, k, stride=1, padding=(k - 1) // 2, bn=bn,
                      act="relu" if relu else "none", bias=bias)


# ----------------------------------------------------------------------------
# Module constructors / apply functions (mirror the PyTorch classes)
# ----------------------------------------------------------------------------
def make_residual(pf, inp, out):
    return {"need_skip": inp != out,
            "skip": make_conv(pf, inp, out, 1, relu=False),
            "bn1": pf.bn(inp),
            "conv1": make_conv(pf, inp, out // 2, 1, relu=False),
            "bn2": pf.bn(out // 2),
            "conv2": make_conv(pf, out // 2, out // 2, 3, relu=False),
            "bn3": pf.bn(out // 2),
            "conv3": make_conv(pf, out // 2, out, 1, relu=False)}


def residual_apply(p, x):
    res = conv_apply(p["skip"], x) if p["need_skip"] else x
    out = bn_relu(x, p["bn1"])
    out = conv_apply(p["conv1"], out)
    out = bn_relu(out, p["bn2"])
    out = conv_apply(p["conv2"], out)
    out = bn_relu(out, p["bn3"])
    out = conv_apply(p["conv3"], out)
    return (out.astype(jnp.float32) + res.astype(jnp.float32)).astype(DTYPE)


def make_bifusion(pf, ch_1, ch_2, r_2, ch_int, ch_out):
    return {"fc1": make_pconv(pf, ch_2, ch_2 // r_2, 1, act="relu"),
            "fc2": make_pconv(pf, ch_2 // r_2, ch_2, 1, act="none"),
            "spatial": make_conv(pf, 2, 1, 7, bn=True, relu=False, bias=False),
            "W_g": make_conv(pf, ch_1, ch_int, 1, bn=True, relu=False),
            "W_x": make_conv(pf, ch_2, ch_int, 1, bn=True, relu=False),
            "W": make_conv(pf, ch_int, ch_int, 3, bn=True, relu=True),
            "residual": make_residual(pf, ch_1 + ch_2 + ch_int, ch_out)}


def bifusion_apply(p, g, x):
    W_g = conv_apply(p["W_g"], g)
    W_x = conv_apply(p["W_x"], x)
    bp = conv_apply(p["W"], (W_g.astype(jnp.float32) *
                             W_x.astype(jnp.float32)).astype(DTYPE))
    # spatial attention on g (sigmoid fused into the Pallas gate kernel)
    gc = jnp.concatenate(
        [jnp.max(g, axis=-1, keepdims=True),
         jnp.mean(g.astype(jnp.float32), axis=-1, keepdims=True).astype(DTYPE)],
        axis=-1)
    att = conv_apply(p["spatial"], gc)           # (B,H,W,1), pre-sigmoid
    g2 = pallas_sigmoid_gate(att, g)
    # channel (SE) attention on x
    xm = jnp.mean(x.astype(jnp.float32), axis=(1, 2), keepdims=True).astype(DTYPE)
    xm = conv_apply(p["fc1"], xm)                # relu
    xm = conv_apply(p["fc2"], xm)                # pre-sigmoid (B,1,1,C)
    x2 = pallas_sigmoid_gate(xm, x)
    fuse = residual_apply(p["residual"],
                          jnp.concatenate([g2, x2, bp], axis=-1))
    return fuse  # Dropout2d: identity in eval mode


def make_attention(pf, F_g, F_l, F_int):
    return {"W_g": make_pconv(pf, F_g, F_int, 1, bn=True, act="none"),
            "W_x": make_pconv(pf, F_l, F_int, 1, bn=True, act="none"),
            "psi": make_pconv(pf, F_int, 1, 1, bn=True, act="none")}


def attention_apply(p, g, x):
    g1 = conv_apply(p["W_g"], g)
    x1 = conv_apply(p["W_x"], x)
    psi = jnp.maximum(g1.astype(jnp.float32) + x1.astype(jnp.float32),
                      0.0).astype(DTYPE)
    psi = conv_apply(p["psi"], psi)              # (B,H,W,1), pre-sigmoid
    return pallas_sigmoid_gate(psi, x)           # x * sigmoid(psi)


def make_doubleconv(pf, inp, out):
    return {"c1": make_pconv(pf, inp, out, 3, padding=1, bn=True, act="relu"),
            "c2": make_pconv(pf, out, out, 3, padding=1, bn=True, act="none"),
            "ci": make_pconv(pf, inp, out, 1, padding=0, bn=True, act="none")}


def doubleconv_apply(p, x):
    y = conv_apply(p["c1"], x)
    y = conv_apply(p["c2"], y)
    idt = conv_apply(p["ci"], x)
    return jnp.maximum(y.astype(jnp.float32) + idt.astype(jnp.float32),
                       0.0).astype(DTYPE)


def make_up(pf, in_ch1, out_ch, in_ch2=0, attn=False):
    return {"conv": make_doubleconv(pf, in_ch1 + in_ch2, out_ch),
            "attn": make_attention(pf, in_ch1, in_ch2, out_ch) if attn else None}


def up_apply(p, x1, x2=None):
    x1 = bilinear_resize(x1, x1.shape[1] * 2, x1.shape[2] * 2).astype(DTYPE)
    if x2 is not None:
        dY = x2.shape[1] - x1.shape[1]
        dX = x2.shape[2] - x1.shape[2]
        if dY or dX:
            x1 = jnp.pad(x1, ((0, 0), (dY // 2, dY - dY // 2),
                              (dX // 2, dX - dX // 2), (0, 0)))
        if p["attn"] is not None:
            x2 = attention_apply(p["attn"], x1, x2)
        x1 = jnp.concatenate([x2, x1], axis=-1)
    return doubleconv_apply(p["conv"], x1)


def make_backbones(pf):
    # TODO(synk): stand-in backbones (resnet50 / deit_base_384 not provided).
    resnet = {
        "conv1": make_pconv(pf, 3, 64, 7, stride=2, padding=3, bn=True,
                            act="relu", bias=False),
        "layer1": make_pconv(pf, 64, 256, 1, bn=True, act="relu", bias=False),
        "layer2": make_pconv(pf, 256, 512, 3, stride=2, padding=1, bn=True,
                             act="relu", bias=False),
        "layer3": make_pconv(pf, 512, 1024, 3, stride=2, padding=1, bn=True,
                             act="relu", bias=False),
    }
    transformer = {"patch": make_pconv(pf, 3, 768, 16, stride=16, padding=0,
                                       act="none", bias=True)}
    return resnet, transformer


def make_params(seed=0, num_classes=1):
    pf = ParamFactory(seed)
    resnet, transformer = make_backbones(pf)
    return {
        "resnet": resnet, "transformer": transformer,
        "up1": make_up(pf, 768, 512),
        "up2": make_up(pf, 512, 256),
        "final_x": [make_conv(pf, 1024, 256, 1, bn=True, relu=True),
                    make_conv(pf, 256, 256, 3, bn=True, relu=True),
                    make_conv(pf, 256, num_classes, 3, bn=False, relu=False)],
        "final_1": [make_conv(pf, 256, 256, 3, bn=True, relu=True),
                    make_conv(pf, 256, num_classes, 3, bn=False, relu=False)],
        "final_2": [make_conv(pf, 256, 256, 3, bn=True, relu=True),
                    make_conv(pf, 256, num_classes, 3, bn=False, relu=False)],
        "up_c": make_bifusion(pf, 1024, 768, 4, 1024, 1024),
        "up_c_1_1": make_bifusion(pf, 512, 512, 2, 512, 512),
        "up_c_1_2": make_up(pf, 1024, 512, 512, attn=True),
        "up_c_2_1": make_bifusion(pf, 256, 256, 1, 256, 256),
        "up_c_2_2": make_up(pf, 512, 256, 256, attn=True),
    }


# ----------------------------------------------------------------------------
# TransFuse_L_384 forward
# ----------------------------------------------------------------------------
def transfuse_forward(params, imgs_nchw):
    imgs = jnp.transpose(imgs_nchw, (0, 2, 3, 1)).astype(DTYPE)   # NHWC once
    rn, tr = params["resnet"], params["transformer"]

    # --- transformer branch (stand-in patch embedding). Its NHWC output IS the
    #     (B,768,24,32)-style token-grid view of the reference code. ---
    x_b = conv_apply(tr["patch"], imgs)
    x_b_1 = up_apply(params["up1"], x_b)
    x_b_2 = up_apply(params["up2"], x_b_1)

    # --- CNN branch (stand-in resnet50 stem/layers) ---
    x_u = conv_apply(rn["conv1"], imgs)
    x_u = maxpool_3x3_s2(x_u)
    x_u_2 = conv_apply(rn["layer1"], x_u)          # 256 ch
    x_u_1 = conv_apply(rn["layer2"], x_u_2)        # 512 ch, /2
    x_u = conv_apply(rn["layer3"], x_u_1)          # 1024 ch, /2

    # --- fusion ---
    x_c = bifusion_apply(params["up_c"], x_u, x_b)
    x_c_1_1 = bifusion_apply(params["up_c_1_1"], x_u_1, x_b_1)
    x_c_1 = up_apply(params["up_c_1_2"], x_c, x_c_1_1)
    x_c_2_1 = bifusion_apply(params["up_c_2_1"], x_u_2, x_b_2)
    x_c_2 = up_apply(params["up_c_2_2"], x_c_1, x_c_2_1)

    # --- heads (NCHW + f32 only at the very end) ---
    map_x = bilinear_resize(seq_apply(params["final_x"], x_c),
                            x_c.shape[1] * 16, x_c.shape[2] * 16)
    map_1 = bilinear_resize(seq_apply(params["final_1"], x_b_2),
                            x_b_2.shape[1] * 4, x_b_2.shape[2] * 4)
    map_2 = bilinear_resize(seq_apply(params["final_2"], x_c_2),
                            x_c_2.shape[1] * 4, x_c_2.shape[2] * 4)
    to_nchw = lambda m: jnp.transpose(m, (0, 3, 1, 2)).astype(jnp.float32)
    return to_nchw(map_x), to_nchw(map_1), to_nchw(map_2)


if __name__ == "__main__":
    key = jax.random.PRNGKey(0)
    B, H, W = 2, 96, 128          # small-scale stand-in for the 384x512 input
    imgs = jax.random.normal(key, (B, 3, H, W), jnp.float32)

    params = make_params(seed=0, num_classes=1)
    map_x, map_1, map_2 = transfuse_forward(params, imgs)
    jax.block_until_ready((map_x, map_1, map_2))

    assert map_x.shape == (B, 1, H, W)
    assert map_1.shape == (B, 1, H, W)
    assert map_2.shape == (B, 1, H, W)
    assert jnp.all(jnp.isfinite(map_x)) and jnp.all(jnp.isfinite(map_2))
    print("KERNEL_OK")
</pallas_src>

<mosaic_0001>
module attributes {stable_mosaic.version = 11 : i64} {
  func.func @_matmul_kernel(%arg0: i32, %arg1: i32, %arg2: i32, %arg3: memref<96x256xbf16, #tpu.memory_space<vmem>>, %arg4: memref<256x256xbf16, #tpu.memory_space<vmem>>, %arg5: memref<1x256xf32, #tpu.memory_space<vmem>>, %arg6: memref<1x256xf32, #tpu.memory_space<vmem>>, %arg7: memref<96x256xbf16, #tpu.memory_space<vmem>>, %arg8: memref<96x256xf32, #tpu.memory_space<vmem>>) attributes {dimension_semantics = [#tpu.dimension_semantics<parallel>, #tpu.dimension_semantics<parallel>, #tpu.dimension_semantics<arbitrary>], iteration_bounds = array<i64: 1, 3, 3>, scalar_prefetch = 0 : i64, scratch_operands = 1 : i64, tpu.core_type = #tpu.core_type<tc>, window_params = [{transform_indices = @transform_0, window_bounds = array<i64: 96, 256>}, {transform_indices = @transform_1, window_bounds = array<i64: 256, 256>}, {transform_indices = @transform_2, window_bounds = array<i64: 1, 256>}, {transform_indices = @transform_3, window_bounds = array<i64: 1, 256>}, {transform_indices = @transform_4, window_bounds = array<i64: 96, 256>}]} {
    %c0_i32 = arith.constant 0 : i32
    %0 = arith.cmpi eq, %arg2, %c0_i32 : i32
    %1 = arith.extui %0 : i1 to i32
    %c0_i32_0 = arith.constant 0 : i32
    %2 = arith.cmpi ne, %1, %c0_i32_0 : i32
    scf.if %2 {
      %cst_9 = arith.constant 0.000000e+00 : f32
      %12 = vector.broadcast %cst_9 : f32 to vector<96x256xf32>
      %c0_10 = arith.constant 0 : index
      %c0_11 = arith.constant 0 : index
      %13 = vector.load %arg8[%c0_10, %c0_11] : memref<96x256xf32, #tpu.memory_space<vmem>>, vector<96x256xf32>
      tpu.vector_store %arg8[%c0_10, %c0_11], %12 {strides = array<i32>} : memref<96x256xf32, #tpu.memory_space<vmem>>, vector<96x256xf32>,
    } else {
    }
    %c0 = arith.constant 0 : index
    %c0_1 = arith.constant 0 : index
    %3 = vector.load %arg8[%c0, %c0_1] : memref<96x256xf32, #tpu.memory_space<vmem>>, vector<96x256xf32>
    %c0_2 = arith.constant 0 : index
    %c0_3 = arith.constant 0 : index
    %4 = vector.load %arg3[%c0_2, %c0_3] : memref<96x256xbf16, #tpu.memory_space<vmem>>, vector<96x256xbf16>
    %c0_4 = arith.constant 0 : index
    %c0_5 = arith.constant 0 : index
    %5 = vector.load %arg4[%c0_4, %c0_5] : memref<256x256xbf16, #tpu.memory_space<vmem>>, vector<256x256xbf16>
    %cst = arith.constant dense<0.000000e+00> : vector<96x256xf32>
    %6 = tpu.matmul %4, %5, %cst {dimension_numbers = #tpu.dot_dimension_numbers<[1], [0], [0], [1], [0, 0, 1, 1], [], []>} : vector<96x256xbf16>, vector<256x256xbf16>, vector<96x256xf32> -> vector<96x256xf32>
    %7 = arith.addf %3, %6 : vector<96x256xf32>
    %c0_6 = arith.constant 0 : index
    %c0_7 = arith.constant 0 : index
    %8 = vector.load %arg8[%c0_6, %c0_7] : memref<96x256xf32, #tpu.memory_space<vmem>>, vector<96x256xf32>
    tpu.vector_store %arg8[%c0_6, %c0_7], %7 {strides = array<i32>} : memref<96x256xf32, #tpu.memory_space<vmem>>, vector<96x256xf32>,
    %c2_i32 = arith.constant 2 : i32
    %9 = arith.cmpi eq, %arg2, %c2_i32 : i32
    %10 = arith.extui %9 : i1 to i32
    %c0_i32_8 = arith.constant 0 : i32
    %11 = arith.cmpi ne, %10, %c0_i32_8 : i32
    scf.if %11 {
      %c0_9 = arith.constant 0 : index
      %c0_10 = arith.constant 0 : index
      %12 = vector.load %arg8[%c0_9, %c0_10] : memref<96x256xf32, #tpu.memory_space<vmem>>, vector<96x256xf32>
      %c0_11 = arith.constant 0 : index
      %c0_12 = arith.constant 0 : index
      %13 = vector.load %arg5[%c0_11, %c0_12] : memref<1x256xf32, #tpu.memory_space<vmem>>, vector<1x256xf32>
      %14 = vector.broadcast %13 : vector<1x256xf32> to vector<96x256xf32>
      %15 = arith.mulf %12, %14 : vector<96x256xf32>
      %c0_13 = arith.constant 0 : index
      %c0_14 = arith.constant 0 : index
      %16 = vector.load %arg6[%c0_13, %c0_14] : memref<1x256xf32, #tpu.memory_space<vmem>>, vector<1x256xf32>
      %17 = vector.broadcast %16 : vector<1x256xf32> to vector<96x256xf32>
      %18 = arith.addf %15, %17 : vector<96x256xf32>
      %19 = arith.truncf %18 : vector<96x256xf32> to vector<96x256xbf16>
      %c0_15 = arith.constant 0 : index
      %c0_16 = arith.constant 0 : index
      %20 = vector.load %arg7[%c0_15, %c0_16] : memref<96x256xbf16, #tpu.memory_space<vmem>>, vector<96x256xbf16>
      tpu.vector_store %arg7[%c0_15, %c0_16], %19 {strides = array<i32>} : memref<96x256xbf16, #tpu.memory_space<vmem>>, vector<96x256xbf16>,
    } else {
    }
    return
  }
  func.func @transform_0(%arg0: i32, %arg1: i32, %arg2: i32) -> (i32, i32) {
    %c0_i32 = arith.constant 0 : i32
    return %arg0, %arg2 : i32, i32
  }
  func.func @transform_1(%arg0: i32, %arg1: i32, %arg2: i32) -> (i32, i32) {
    %c0_i32 = arith.constant 0 : i32
    return %arg2, %arg1 : i32, i32
  }
  func.func @transform_2(%arg0: i32, %arg1: i32, %arg2: i32) -> (i32, i32) {
    %c0_i32 = arith.constant 0 : i32
    %c0_i32_0 = arith.constant 0 : i32
    return %c0_i32, %arg1 : i32, i32
  }
  func.func @transform_3(%arg0: i32, %arg1: i32, %arg2: i32) -> (i32, i32) {
    %c0_i32 = arith.constant 0 : i32
    %c0_i32_0 = arith.constant 0 : i32
    return %c0_i32, %arg1 : i32, i32
  }
  func.func @transform_4(%arg0: i32, %arg1: i32, %arg2: i32) -> (i32, i32) {
    %c0_i32 = arith.constant 0 : i32
    return %arg0, %arg1 : i32, i32
  }
}

</mosaic_0001>

<llo_original>
// kernel: tpu_custom_call.1
$region0: #{tpu_custom_call.1}
  #allocation0 [shape = 'u32[]', space=smem, size = 0x4, offset = 0x4, fixed_abs, tag = 'smem constant byte address 0x4 - core index']
  #allocation1 [shape = 'u32[144,128]{1,0:T(1,128)}', space=vmem, size = 0x12000, scoped, tag = 'internal scratch']
  #allocation2 [shape = 'f32[96,256]{1,0:T(8,128)}', space=vmem, size = 0x18000, scoped, tag = 'scratch operand']
  %s0 = inlined_call_operand.hbm [shape: bf16[96,768], index: 0, kind: input, shape index: {}]
  %s1 = inlined_call_operand.hbm [shape: bf16[768,768], index: 1, kind: input, shape index: {}]
  %s2 = inlined_call_operand.hbm [shape: f32[1,768], index: 2, kind: input, shape index: {}]
  %s3 = inlined_call_operand.hbm [shape: f32[1,768], index: 3, kind: input, shape index: {}]
  %s4 = inlined_call_operand.hbm [shape: bf16[96,768], index: 4, kind: output, shape index: {}]
  %s5 = sld [smem:[#allocation0]]
  $region73: #{tpu_custom_call.1} parent=0
    _
  %s7 = ssub.s32 1, %s5
  %s8 = scalar_select 0, %s7, %s5
  $region1: #{tpu_custom_call.1} parent=0
    #allocation3 [shape = 'u8[98304]{0}', space=vmem, size = 0x18000, scoped, tag = 'input window, operand 0']
    #allocation4 [shape = 's32[2]{0}', space=sflag, size = 0x8, scoped, tag = 'scoped memory for tpu_custom_call.1']
    #allocation5 [shape = 's32[2]{0}', space=sflag, size = 0x8, scoped, tag = 'scoped memory for tpu_custom_call.1']
    #allocation6 [shape = 'u8[262144]{0}', space=vmem, size = 0x40000, scoped, tag = 'input window, operand 1']
    #allocation7 [shape = 's32[2]{0}', space=sflag, size = 0x8, scoped, tag = 'scoped memory for tpu_custom_call.1']
    #allocation8 [shape = 'u8[2048]{0}', space=vmem, size = 0x800, scoped, tag = 'input window, operand 2']
    #allocation9 [shape = 'u8[2048]{0}', space=vmem, size = 0x800, scoped, tag = 'input window, operand 3']
    #allocation10 [shape = 's32[2]{0}', space=sflag, size = 0x8, scoped, tag = 'scoped memory for tpu_custom_call.1']
    #allocation11 [shape = 'u8[98304]{0}', space=vmem, size = 0x18000, scoped, tag = 'output window, operand 0']
    %9 = vsyncpa [#allocation4], 0
    %s10 = scalar_lea.sflag [#allocation4], 1
    %11 = vsyncpa %s10, 0
    %12 = vsyncpa [#allocation7], 0
    %s13 = scalar_lea.sflag [#allocation7], 1
    %14 = vsyncpa %s13, 0
    %15 = vsyncpa [#allocation10], 0
    %s16 = scalar_lea.sflag [#allocation10], 1
    %17 = vsyncpa %s16, 0
    %18 = vsyncpa [#allocation5], 0
    %s19 = scalar_lea.sflag [#allocation5], 1
    %20 = vsyncpa %s19, 0
    loop: start=0, step=1, limit=11
    $region2: #{tpu_custom_call.1} parent=1 // loop_pre_header
      _
    $region3: #{tpu_custom_call.1} parent=1 // loop_header
      %s22 = sphi 0, %s26
      %p23 = scmp.ge.s32.totalorder %s22, 11
      %s29 = sphi 0, %s48
      %s30 = sphi 0, %s44
      %s31 = sphi 0, %s40
      %s32 = sphi 0, %s29
      %s33 = sphi 0, %s30
      %s34 = sphi 0, %s31
      %s35 = sphi 0, %s32
      %s36 = sphi 0, %s33
      %s37 = sphi 0, %s34
      %s53 = sphi 0, %s55
      %s56 = sphi 0, %s53
      %s57 = sphi 0, %s56
      %s73 = sphi 0, %s57
      %s81 = sphi 0, %s83
      %s84 = sphi 0, %s81
      %s85 = sphi 0, %s84
      %s101 = sphi 0, %s85
      %s107 = sphi 0, %s109
      %s110 = sphi 0, %s107
      %s111 = sphi 0, %s110
      %s127 = sphi 0, %s111
      %s133 = sphi 0, %s135
      %s136 = sphi 0, %s133
      %s137 = sphi 0, %s136
      %s153 = sphi 0, %s137
      %s161 = sphi 0, %s163
      %s164 = sphi 0, %s161
      %s165 = sphi 0, %s164
      %s181 = sphi 0, %s165
    $region4: #{tpu_custom_call.1} parent=1 // loop_header_branch
      %25 = sbr.rel (%p23) target = $region8
    $region5: #{tpu_custom_call.1} parent=1 // loop_body
      %s27 = ssub.s32 %s22, 1
      %s28 = ssub.s32 %s22, 2
      %s38 = sadd.s32 1, %s31
      %p39 = scmp.ge.s32.totalorder %s38, 3
      %s40 = scalar_select %p39, 0, %s38
      %s41 = sadd.s32 1, %s30
      %s42 = scalar_select %p39, %s41, %s30
      %p43 = scmp.ge.s32.totalorder %s42, 3
      %s44 = scalar_select %p43, 0, %s42
      %s45 = sadd.s32 1, %s29
      %s46 = scalar_select %p43, %s45, %s29
      %p47 = scmp.ge.s32.totalorder %s46, 1
      %s48 = scalar_select %p47, 0, %s46
      %s49 = ssub.s32 %s29, %s48
      %s50 = ssub.s32 %s31, %s40
      %s51 = sor.u32 %s49, %s50
      %p52 = scmp.eq.s32.totalorder %s51, 0
      %s54 = sadd.s32 %s53, 1
      %s55 = scalar_select %p52, %s53, %s54
      %p58 = pneg %p52
      %p59 = scmp.eq.s32.totalorder %s22, 8
      %p60 = por %p58, %p59
      %p61 = scmp.ne.s32.totalorder %s53, %s56
      %p62 = scmp.eq.s32.totalorder %s22, 0
      %p63 = por %p61, %p62
      %p64 = scmp.ne.s32.totalorder %s53, %s56
      %p65 = scmp.eq.s32.totalorder %s27, 8
      %p66 = por %p64, %p65
      %p67 = scmp.ne.s32.totalorder %s56, %s57
      %p68 = scmp.eq.s32.totalorder %s27, 0
      %p69 = por %p67, %p68
      %p70 = scmp.ne.s32.totalorder %s56, %s57
      %p71 = scmp.eq.s32.totalorder %s28, 8
      %p72 = por %p70, %p71
      %p74 = scmp.ne.s32.totalorder %s57, %s73
      %p75 = scmp.eq.s32.totalorder %s28, 0
      %p76 = por %p74, %p75
      %s77 = ssub.s32 %s31, %s40
      %s78 = ssub.s32 %s30, %s44
      %s79 = sor.u32 %s77, %s78
      %p80 = scmp.eq.s32.totalorder %s79, 0
      %s82 = sadd.s32 %s81, 1
      %s83 = scalar_select %p80, %s81, %s82
      %p86 = pneg %p80
      %p87 = scmp.eq.s32.totalorder %s22, 8
      %p88 = por %p86, %p87
      %p89 = scmp.ne.s32.totalorder %s81, %s84
      %p90 = scmp.eq.s32.totalorder %s22, 0
      %p91 = por %p89, %p90
      %p92 = scmp.ne.s32.totalorder %s81, %s84
      %p93 = scmp.eq.s32.totalorder %s27, 8
      %p94 = por %p92, %p93
      %p95 = scmp.ne.s32.totalorder %s84, %s85
      %p96 = scmp.eq.s32.totalorder %s27, 0
      %p97 = por %p95, %p96
      %p98 = scmp.ne.s32.totalorder %s84, %s85
      %p99 = scmp.eq.s32.totalorder %s28, 8
      %p100 = por %p98, %p99
      %p102 = scmp.ne.s32.totalorder %s85, %s101
      %p103 = scmp.eq.s32.totalorder %s28, 0
      %p104 = por %p102, %p103
      %s105 = ssub.s32 %s30, %s44
      %p106 = scmp.eq.s32.totalorder %s105, 0
      %s108 = sadd.s32 %s107, 1
      %s109 = scalar_select %p106, %s107, %s108
      %p112 = pneg %p106
      %p113 = scmp.eq.s32.totalorder %s22, 8
      %p114 = por %p112, %p113
      %p115 = scmp.ne.s32.totalorder %s107, %s110
      %p116 = scmp.eq.s32.totalorder %s22, 0
      %p117 = por %p115, %p116
      %p118 = scmp.ne.s32.totalorder %s107, %s110
      %p119 = scmp.eq.s32.totalorder %s27, 8
      %p120 = por %p118, %p119
      %p121 = scmp.ne.s32.totalorder %s110, %s111
      %p122 = scmp.eq.s32.totalorder %s27, 0
      %p123 = por %p121, %p122
      %p124 = scmp.ne.s32.totalorder %s110, %s111
      %p125 = scmp.eq.s32.totalorder %s28, 8
      %p126 = por %p124, %p125
      %p128 = scmp.ne.s32.totalorder %s111, %s127
      %p129 = scmp.eq.s32.totalorder %s28, 0
      %p130 = por %p128, %p129
      %s131 = ssub.s32 %s30, %s44
      %p132 = scmp.eq.s32.totalorder %s131, 0
      %s134 = sadd.s32 %s133, 1
      %s135 = scalar_select %p132, %s133, %s134
      %p138 = pneg %p132
      %p139 = scmp.eq.s32.totalorder %s22, 8
      %p140 = por %p138, %p139
      %p141 = scmp.ne.s32.totalorder %s133, %s136
      %p142 = scmp.eq.s32.totalorder %s22, 0
      %p143 = por %p141, %p142
      %p144 = scmp.ne.s32.totalorder %s133, %s136
      %p145 = scmp.eq.s32.totalorder %s27, 8
      %p146 = por %p144, %p145
      %p147 = scmp.ne.s32.totalorder %s136, %s137
      %p148 = scmp.eq.s32.totalorder %s27, 0
      %p149 = por %p147, %p148
      %p150 = scmp.ne.s32.totalorder %s136, %s137
      %p151 = scmp.eq.s32.totalorder %s28, 8
      %p152 = por %p150, %p151
      %p154 = scmp.ne.s32.totalorder %s137, %s153
      %p155 = scmp.eq.s32.totalorder %s28, 0
      %p156 = por %p154, %p155
      %s157 = ssub.s32 %s29, %s48
      %s158 = ssub.s32 %s30, %s44
      %s159 = sor.u32 %s157, %s158
      %p160 = scmp.eq.s32.totalorder %s159, 0
      %s162 = sadd.s32 %s161, 1
      %s163 = scalar_select %p160, %s161, %s162
      %p166 = pneg %p160
      %p167 = scmp.eq.s32.totalorder %s22, 8
      %p168 = por %p166, %p167
      %p169 = scmp.ne.s32.totalorder %s161, %s164
      %p170 = scmp.eq.s32.totalorder %s22, 0
      %p171 = por %p169, %p170
      %p172 = scmp.ne.s32.totalorder %s161, %s164
      %p173 = scmp.eq.s32.totalorder %s27, 8
      %p174 = por %p172, %p173
      %p175 = scmp.ne.s32.totalorder %s164, %s165
      %p176 = scmp.eq.s32.totalorder %s27, 0
      %p177 = por %p175, %p176
      %p178 = scmp.ne.s32.totalorder %s164, %s165
      %p179 = scmp.eq.s32.totalorder %s28, 8
      %p180 = por %p178, %p179
      %p182 = scmp.ne.s32.totalorder %s165, %s181
      %p183 = scmp.eq.s32.totalorder %s28, 0
      %p184 = por %p182, %p183
      %p185 = scmp.le.s32.totalorder 1, %s22
      %p186 = scmp.lt.s32.totalorder %s22, 10
      %p187 = pnand %p185, %p186
      %p188 = pneg %p187
      // Predicated region
      $region9: #{tpu_custom_call.1} parent=5 // pred_check
        _
      $region10: #{tpu_custom_call.1} parent=5 // pred_check_branch
        %190 = sbr.rel (%p187) target = $region12
      $region11: #{tpu_custom_call.1} parent=5 // pred_region
        %s191 = ssub.s32 %s22, 1
      $region12: #{tpu_custom_call.1} parent=5 // pred_fallthru
        _
      %p192 = scmp.lt.s32.totalorder %s22, 9
      // Predicated region
      $region13: #{tpu_custom_call.1} parent=5 // pred_check
        %p193 = pneg %p192
      $region14: #{tpu_custom_call.1} parent=5 // pred_check_branch
        %195 = sbr.rel (%p193) target = $region16
      $region15: #{tpu_custom_call.1} parent=5 // pred_region
        // Predicated region
        $region17: #{tpu_custom_call.1} parent=15 // pred_check
          %p196 = pneg %p63
        $region18: #{tpu_custom_call.1} parent=15 // pred_check_branch
          %198 = sbr.rel (%p196) target = $region20
        $region19: #{tpu_custom_call.1} parent=15 // pred_region
          %s199 = sand.u32 %s53, 1
          %s200 = scalar_lea.sflag [#allocation4], %s199
          %s201 = sand.u32 %s53, 1
          %s202 = smul.addr %s201, 96
          %s203 = scalar_lea.vmem [#allocation3], %s202
          %s204 = smul.u32 12, %s29
          %s205 = smul.u32 2, %s31
          %s207 = ssub.s32 1536, 1536
          %208 = vsyncadd %s200, %s207
          %s209 = smul.addr %s204, 6
          %s210 = sadd.s32 %s205, %s209
          %s211 = smul.addr %s210, 64
          %s212 = scalar_lea.hbm %s0, %s211
          %s213 = sshll.u32 %s203, 4
          %s214 = int_to_ptr.vmem [resolvable:$true] %s213
          %219 = dma.hbm_to_vmem [thread:$0]  %s212, 1536, %s214, %s200, 384, 128, 8
        $region20: #{tpu_custom_call.1} parent=15 // pred_fallthru
          _
        // Predicated region
        $region21: #{tpu_custom_call.1} parent=15 // pred_check
          %p220 = pneg %p91
        $region22: #{tpu_custom_call.1} parent=15 // pred_check_branch
          %222 = sbr.rel (%p220) target = $region24
        $region23: #{tpu_custom_call.1} parent=15 // pred_region
          %s223 = sand.u32 %s22, 1
          %s224 = scalar_lea.sflag [#allocation7], %s223
          %s225 = sand.u32 %s81, 1
          %s226 = smul.addr %s225, 256
          %s227 = scalar_lea.vmem [#allocation6], %s226
          %s228 = smul.u32 32, %s31
          %s229 = smul.u32 2, %s30
          %s231 = ssub.s32 4096, 4096
          %232 = vsyncadd %s224, %s231
          %s233 = smul.addr %s228, 6
          %s234 = sadd.s32 %s229, %s233
          %s235 = smul.addr %s234, 64
          %s236 = scalar_lea.hbm %s1, %s235
          %s237 = sshll.u32 %s227, 4
          %s238 = int_to_ptr.vmem [resolvable:$true] %s237
          %243 = dma.hbm_to_vmem [thread:$0]  %s236, 4096, %s238, %s224, 384, 128, 8
        $region24: #{tpu_custom_call.1} parent=15 // pred_fallthru
          _
        // Predicated region
        $region25: #{tpu_custom_call.1} parent=15 // pred_check
          %p244 = pneg %p117
        $region26: #{tpu_custom_call.1} parent=15 // pred_check_branch
          %246 = sbr.rel (%p244) target = $region28
        $region27: #{tpu_custom_call.1} parent=15 // pred_region
          %s247 = sand.u32 %s22, 1
          %s248 = scalar_lea.sflag [#allocation7], %s247
          %s249 = sand.u32 %s107, 1
          %s250 = smul.addr %s249, 2
          %s251 = scalar_lea.vmem [#allocation8], %s250
          %s252 = smul.u32 2, %s30
          %s254 = ssub.s32 32, 32
          %255 = vsyncadd %s248, %s254
          %s256 = smul.addr %s252, 16
          %s257 = scalar_lea.hbm %s2, %s256
          %s259 = sshll.u32 %s251, 4
          %s260 = int_to_ptr.vmem [resolvable:$true] %s259
          %262 = dma.hbm_to_vmem [thread:$0]  %s257, 32, %s260, %s248
        $region28: #{tpu_custom_call.1} parent=15 // pred_fallthru
          _
        // Predicated region
        $region29: #{tpu_custom_call.1} parent=15 // pred_check
          %p263 = pneg %p143
        $region30: #{tpu_custom_call.1} parent=15 // pred_check_branch
          %265 = sbr.rel (%p263) target = $region32
        $region31: #{tpu_custom_call.1} parent=15 // pred_region
          %s266 = sand.u32 %s133, 1
          %s267 = scalar_lea.sflag [#allocation10], %s266
          %s268 = sand.u32 %s133, 1
          %s269 = smul.addr %s268, 2
          %s270 = scalar_lea.vmem [#allocation9], %s269
          %s271 = smul.u32 2, %s30
          %s273 = ssub.s32 32, 32
          %274 = vsyncadd %s267, %s273
          %s275 = smul.addr %s271, 16
          %s276 = scalar_lea.hbm %s3, %s275
          %s278 = sshll.u32 %s270, 4
          %s279 = int_to_ptr.vmem [resolvable:$true] %s278
          %281 = dma.hbm_to_vmem [thread:$0]  %s276, 32, %s279, %s267
        $region32: #{tpu_custom_call.1} parent=15 // pred_fallthru
          _
      $region16: #{tpu_custom_call.1} parent=5 // pred_fallthru
        _
      %p282 = scmp.le.s32.totalorder 1, %s22
      %p283 = scmp.lt.s32.totalorder %s22, 10
      %p284 = pnand %p282, %p283
      %p285 = pneg %p284
      // Predicated region
      $region33: #{tpu_custom_call.1} parent=5 // pred_check
        _
      $region34: #{tpu_custom_call.1} parent=5 // pred_check_branch
        %287 = sbr.rel (%p284) target = $region36
      $region35: #{tpu_custom_call.1} parent=5 // pred_region
        %s288 = ssub.s32 %s22, 1
        %s289 = sand.u32 %s56, 1
        %s290 = scalar_lea.sflag [#allocation4], %s289
        %s291 = sand.u32 %s56, 1
        %s292 = smul.addr %s291, 96
        %s293 = scalar_lea.vmem [#allocation3], %s292
        // Predicated region
        $region37: #{tpu_custom_call.1} parent=35 // pred_check
          %p294 = pneg %p69
        $region38: #{tpu_custom_call.1} parent=35 // pred_check_branch
          %296 = sbr.rel (%p294) target = $region40
        $region39: #{tpu_custom_call.1} parent=35 // pred_region
          %297 = dma.done %s290, 1536
        $region40: #{tpu_custom_call.1} parent=35 // pred_fallthru
          _
        %s298 = sand.u32 %s27, 1
        %s299 = scalar_lea.sflag [#allocation7], %s298
        %s300 = sand.u32 %s84, 1
        %s301 = smul.addr %s300, 256
        %s302 = scalar_lea.vmem [#allocation6], %s301
        // Predicated region
        $region41: #{tpu_custom_call.1} parent=35 // pred_check
          %p303 = pneg %p97
        $region42: #{tpu_custom_call.1} parent=35 // pred_check_branch
          %305 = sbr.rel (%p303) target = $region44
        $region43: #{tpu_custom_call.1} parent=35 // pred_region
          %306 = dma.done %s299, 4096
        $region44: #{tpu_custom_call.1} parent=35 // pred_fallthru
          _
        %s307 = sand.u32 %s27, 1
        %s308 = scalar_lea.sflag [#allocation7], %s307
        %s309 = sand.u32 %s110, 1
        %s310 = smul.addr %s309, 2
        %s311 = scalar_lea.vmem [#allocation8], %s310
        // Predicated region
        $region45: #{tpu_custom_call.1} parent=35 // pred_check
          %p312 = pneg %p123
        $region46: #{tpu_custom_call.1} parent=35 // pred_check_branch
          %314 = sbr.rel (%p312) target = $region48
        $region47: #{tpu_custom_call.1} parent=35 // pred_region
          %315 = dma.done %s308, 32
        $region48: #{tpu_custom_call.1} parent=35 // pred_fallthru
          _
        %s316 = sand.u32 %s136, 1
        %s317 = scalar_lea.sflag [#allocation10], %s316
        %s318 = sand.u32 %s136, 1
        %s319 = smul.addr %s318, 2
        %s320 = scalar_lea.vmem [#allocation9], %s319
        // Predicated region
        $region49: #{tpu_custom_call.1} parent=35 // pred_check
          %p321 = pneg %p149
        $region50: #{tpu_custom_call.1} parent=35 // pred_check_branch
          %323 = sbr.rel (%p321) target = $region52
        $region51: #{tpu_custom_call.1} parent=35 // pred_region
          %324 = dma.done %s317, 32
        $region52: #{tpu_custom_call.1} parent=35 // pred_fallthru
          _
        %s325 = sand.u32 %s56, 1
        %s326 = scalar_lea.sflag [#allocation4], %s325
        %s327 = sand.u32 %s56, 1
        %s328 = smul.addr %s327, 96
        %s329 = scalar_lea.vmem [#allocation3], %s328
        %p330 = pneg %p69
        %p331 = pneg %p66
        %s332 = sand.u32 %s27, 1
        %s333 = scalar_lea.sflag [#allocation7], %s332
        %s334 = sand.u32 %s84, 1
        %s335 = smul.addr %s334, 256
        %s336 = scalar_lea.vmem [#allocation6], %s335
        %p337 = pneg %p97
        %p338 = pneg %p94
        %s339 = sand.u32 %s27, 1
        %s340 = scalar_lea.sflag [#allocation7], %s339
        %s341 = sand.u32 %s110, 1
        %s342 = smul.addr %s341, 2
        %s343 = scalar_lea.vmem [#allocation8], %s342
        %p344 = pneg %p123
        %p345 = pneg %p120
        %s346 = sand.u32 %s136, 1
        %s347 = scalar_lea.sflag [#allocation10], %s346
        %s348 = sand.u32 %s136, 1
        %s349 = smul.addr %s348, 2
        %s350 = scalar_lea.vmem [#allocation9], %s349
        %p351 = pneg %p149
        %p352 = pneg %p146
        %p353 = pneg %p177
        %p354 = pneg %p174
        %s355 = sand.u32 %s164, 1
        %s356 = scalar_lea.sflag [#allocation5], %s355
        %s357 = sand.u32 %s164, 1
        %s358 = smul.addr %s357, 96
        %s359 = scalar_lea.vmem [#allocation11], %s358
        %s360 = smul.u32 12, %s32
        %s361 = smul.u32 2, %s34
        %s362 = smul.u32 32, %s34
        %s363 = smul.u32 2, %s33
        %s364 = smul.u32 2, %s33
        %s365 = smul.u32 2, %s33
        %s366 = smul.u32 12, %s32
        %s367 = smul.u32 2, %s33
        %p368 = scmp.eq.s32.totalorder %s34, 0
        // Predicated region
        $region53: #{tpu_custom_call.1} parent=35 // pred_check
          %p369 = pneg %p368
        $region54: #{tpu_custom_call.1} parent=35 // pred_check_branch
          %371 = sbr.rel (%p369) target = $region56
        $region55: #{tpu_custom_call.1} parent=35 // pred_region
          %372 = vst [vmem:[#allocation2] sm:$0xff] 0.0
          %373 = vst [vmem:[#allocation2 + $0x8] sm:$0xff] 0.0
          %374 = vst [vmem:[#allocation2 + $0x10] sm:$0xff] 0.0
          %375 = vst [vmem:[#allocation2 + $0x18] sm:$0xff] 0.0
          %376 = vst [vmem:[#allocation2 + $0x20] sm:$0xff] 0.0
          %377 = vst [vmem:[#allocation2 + $0x28] sm:$0xff] 0.0
          %378 = vst [vmem:[#allocation2 + $0x30] sm:$0xff] 0.0
          %379 = vst [vmem:[#allocation2 + $0x38] sm:$0xff] 0.0
          %380 = vst [vmem:[#allocation2 + $0x40] sm:$0xff] 0.0
          %381 = vst [vmem:[#allocation2 + $0x48] sm:$0xff] 0.0
          %382 = vst [vmem:[#allocation2 + $0x50] sm:$0xff] 0.0
          %383 = vst [vmem:[#allocation2 + $0x58] sm:$0xff] 0.0
          %384 = vst [vmem:[#allocation2 + $0x60] sm:$0xff] 0.0
          %385 = vst [vmem:[#allocation2 + $0x68] sm:$0xff] 0.0
          %386 = vst [vmem:[#allocation2 + $0x70] sm:$0xff] 0.0
          %387 = vst [vmem:[#allocation2 + $0x78] sm:$0xff] 0.0
          %388 = vst [vmem:[#allocation2 + $0x80] sm:$0xff] 0.0
          %389 = vst [vmem:[#allocation2 + $0x88] sm:$0xff] 0.0
          %390 = vst [vmem:[#allocation2 + $0x90] sm:$0xff] 0.0
          %391 = vst [vmem:[#allocation2 + $0x98] sm:$0xff] 0.0
          %392 = vst [vmem:[#allocation2 + $0xa0] sm:$0xff] 0.0
          %393 = vst [vmem:[#allocation2 + $0xa8] sm:$0xff] 0.0
          %394 = vst [vmem:[#allocation2 + $0xb0] sm:$0xff] 0.0
          %395 = vst [vmem:[#allocation2 + $0xb8] sm:$0xff] 0.0
        $region56: #{tpu_custom_call.1} parent=35 // pred_fallthru
          _
        %v396 = vld [vmem:[#allocation2] sm:$0xff]
        %v397 = vld [vmem:[#allocation2 + $0x8] sm:$0xff]
        %v398 = vld [vmem:[#allocation2 + $0x10] sm:$0xff]
        %v399 = vld [vmem:[#allocation2 + $0x18] sm:$0xff]
        %v400 = vld [vmem:[#allocation2 + $0x20] sm:$0xff]
        %v401 = vld [vmem:[#allocation2 + $0x28] sm:$0xff]
        %v402 = vld [vmem:[#allocation2 + $0x30] sm:$0xff]
        %v403 = vld [vmem:[#allocation2 + $0x38] sm:$0xff]
        %v404 = vld [vmem:[#allocation2 + $0x40] sm:$0xff]
        %v405 = vld [vmem:[#allocation2 + $0x48] sm:$0xff]
        %v406 = vld [vmem:[#allocation2 + $0x50] sm:$0xff]
        %v407 = vld [vmem:[#allocation2 + $0x58] sm:$0xff]
        %v408 = vld [vmem:[#allocation2 + $0x60] sm:$0xff]
        %v409 = vld [vmem:[#allocation2 + $0x68] sm:$0xff]
        %v410 = vld [vmem:[#allocation2 + $0x70] sm:$0xff]
        %v411 = vld [vmem:[#allocation2 + $0x78] sm:$0xff]
        %v412 = vld [vmem:[#allocation2 + $0x80] sm:$0xff]
        %v413 = vld [vmem:[#allocation2 + $0x88] sm:$0xff]
        %v414 = vld [vmem:[#allocation2 + $0x90] sm:$0xff]
        %v415 = vld [vmem:[#allocation2 + $0x98] sm:$0xff]
        %v416 = vld [vmem:[#allocation2 + $0xa0] sm:$0xff]
        %v417 = vld [vmem:[#allocation2 + $0xa8] sm:$0xff]
        %v418 = vld [vmem:[#allocation2 + $0xb0] sm:$0xff]
        %v419 = vld [vmem:[#allocation2 + $0xb8] sm:$0xff]
        %v420 = vld [vmem:[%s293] sm:$0xff]
        %v421 = vld [vmem:[%s293 + $0x8] sm:$0xff]
        %v422 = vld [vmem:[%s293 + $0x10] sm:$0xff]
        %v423 = vld [vmem:[%s293 + $0x18] sm:$0xff]
        %v424 = vld [vmem:[%s293 + $0x20] sm:$0xff]
        %v425 = vld [vmem:[%s293 + $0x28] sm:$0xff]
        %v426 = vld [vmem:[%s293 + $0x30] sm:$0xff]
        %v427 = vld [vmem:[%s293 + $0x38] sm:$0xff]
        %v428 = vld [vmem:[%s293 + $0x40] sm:$0xff]
        %v429 = vld [vmem:[%s293 + $0x48] sm:$0xff]
        %v430 = vld [vmem:[%s293 + $0x50] sm:$0xff]
        %v431 = vld [vmem:[%s293 + $0x58] sm:$0xff]
        %v432 = vld [vmem:[%s302] sm:$0xff]
        %v433 = vld [vmem:[%s302 + $0x8] sm:$0xff]
        %v434 = vld [vmem:[%s302 + $0x10] sm:$0xff]
        %v435 = vld [vmem:[%s302 + $0x18] sm:$0xff]
        %v436 = vld [vmem:[%s302 + $0x20] sm:$0xff]
        %v437 = vld [vmem:[%s302 + $0x28] sm:$0xff]
        %v438 = vld [vmem:[%s302 + $0x30] sm:$0xff]
        %v439 = vld [vmem:[%s302 + $0x38] sm:$0xff]
        %v440 = vld [vmem:[%s302 + $0x40] sm:$0xff]
        %v441 = vld [vmem:[%s302 + $0x48] sm:$0xff]
        %v442 = vld [vmem:[%s302 + $0x50] sm:$0xff]
        %v443 = vld [vmem:[%s302 + $0x58] sm:$0xff]
        %v444 = vld [vmem:[%s302 + $0x60] sm:$0xff]
        %v445 = vld [vmem:[%s302 + $0x68] sm:$0xff]
        %v446 = vld [vmem:[%s302 + $0x70] sm:$0xff]
        %v447 = vld [vmem:[%s302 + $0x78] sm:$0xff]
        %v448 = vld [vmem:[%s302 + $0x80] sm:$0xff]
        %v449 = vld [vmem:[%s302 + $0x88] sm:$0xff]
        %v450 = vld [vmem:[%s302 + $0x90] sm:$0xff]
        %v451 = vld [vmem:[%s302 + $0x98] sm:$0xff]
        %v452 = vld [vmem:[%s302 + $0xa0] sm:$0xff]
        %v453 = vld [vmem:[%s302 + $0xa8] sm:$0xff]
        %v454 = vld [vmem:[%s302 + $0xb0] sm:$0xff]
        %v455 = vld [vmem:[%s302 + $0xb8] sm:$0xff]
        %v456 = vld [vmem:[%s302 + $0xc0] sm:$0xff]
        %v457 = vld [vmem:[%s302 + $0xc8] sm:$0xff]
        %v458 = vld [vmem:[%s302 + $0xd0] sm:$0xff]
        %v459 = vld [vmem:[%s302 + $0xd8] sm:$0xff]
        %v460 = vld [vmem:[%s302 + $0xe0] sm:$0xff]
        %v461 = vld [vmem:[%s302 + $0xe8] sm:$0xff]
        %v462 = vld [vmem:[%s302 + $0xf0] sm:$0xff]
        %v463 = vld [vmem:[%s302 + $0xf8] sm:$0xff]
        %v476 = vunpack.c.l.b16 %v420
        %v477 = vunpack.c.h.b16 %v420
        %v478 = vunpack.c.l.b16 %v421
        %v479 = vunpack.c.h.b16 %v421
        %v480 = vunpack.c.l.b16 %v422
        %v481 = vunpack.c.h.b16 %v422
        %v482 = vunpack.c.l.b16 %v423
        %v483 = vunpack.c.h.b16 %v423
        %v484 = vunpack.c.l.b16 %v424
        %v485 = vunpack.c.h.b16 %v424
        %v486 = vunpack.c.l.b16 %v425
        %v487 = vunpack.c.h.b16 %v425
        %v488 = vunpack.c.l.b16 %v426
        %v489 = vunpack.c.h.b16 %v426
        %v490 = vunpack.c.l.b16 %v427
        %v491 = vunpack.c.h.b16 %v427
        %v492 = vunpack.c.l.b16 %v428
        %v493 = vunpack.c.h.b16 %v428
        %v494 = vunpack.c.l.b16 %v429
        %v495 = vunpack.c.h.b16 %v429
        %v496 = vunpack.c.l.b16 %v430
        %v497 = vunpack.c.h.b16 %v430
        %v498 = vunpack.c.l.b16 %v431
        %v499 = vunpack.c.h.b16 %v431
        %v500 = vpack.c.b16 %v478, %v476
        %v501 = vpack.c.b16 %v479, %v477
        %v502 = vpack.c.b16 %v482, %v480
        %v503 = vpack.c.b16 %v483, %v481
        %v504 = vpack.c.b16 %v486, %v484
        %v505 = vpack.c.b16 %v487, %v485
        %v506 = vpack.c.b16 %v490, %v488
        %v507 = vpack.c.b16 %v491, %v489
        %v508 = vpack.c.b16 %v494, %v492
        %v509 = vpack.c.b16 %v495, %v493
        %v510 = vpack.c.b16 %v498, %v496
        %v511 = vpack.c.b16 %v499, %v497
        %v556 = vunpack.c.l.b16 %v432
        %v557 = vunpack.c.h.b16 %v432
        %v558 = vunpack.c.l.b16 %v433
        %v559 = vunpack.c.h.b16 %v433
        %v560 = vunpack.c.l.b16 %v434
        %v561 = vunpack.c.h.b16 %v434
        %v562 = vunpack.c.l.b16 %v435
        %v563 = vunpack.c.h.b16 %v435
        %v564 = vunpack.c.l.b16 %v436
        %v565 = vunpack.c.h.b16 %v436
        %v566 = vunpack.c.l.b16 %v437
        %v567 = vunpack.c.h.b16 %v437
        %v568 = vunpack.c.l.b16 %v438
        %v569 = vunpack.c.h.b16 %v438
        %v570 = vunpack.c.l.b16 %v439
        %v571 = vunpack.c.h.b16 %v439
        %v572 = vunpack.c.l.b16 %v440
        %v573 = vunpack.c.h.b16 %v440
        %v574 = vunpack.c.l.b16 %v441
        %v575 = vunpack.c.h.b16 %v441
        %v576 = vunpack.c.l.b16 %v442
        %v577 = vunpack.c.h.b16 %v442
        %v578 = vunpack.c.l.b16 %v443
        %v579 = vunpack.c.h.b16 %v443
        %v580 = vunpack.c.l.b16 %v444
        %v581 = vunpack.c.h.b16 %v444
        %v582 = vunpack.c.l.b16 %v445
        %v583 = vunpack.c.h.b16 %v445
        %v584 = vunpack.c.l.b16 %v446
        %v585 = vunpack.c.h.b16 %v446
        %v586 = vunpack.c.l.b16 %v447
        %v587 = vunpack.c.h.b16 %v447
        %v588 = vunpack.c.l.b16 %v448
        %v589 = vunpack.c.h.b16 %v448
        %v590 = vunpack.c.l.b16 %v449
        %v591 = vunpack.c.h.b16 %v449
        %v592 = vunpack.c.l.b16 %v450
        %v593 = vunpack.c.h.b16 %v450
        %v594 = vunpack.c.l.b16 %v451
        %v595 = vunpack.c.h.b16 %v451
        %v596 = vunpack.c.l.b16 %v452
        %v597 = vunpack.c.h.b16 %v452
        %v598 = vunpack.c.l.b16 %v453
        %v599 = vunpack.c.h.b16 %v453
        %v600 = vunpack.c.l.b16 %v454
        %v601 = vunpack.c.h.b16 %v454
        %v602 = vunpack.c.l.b16 %v455
        %v603 = vunpack.c.h.b16 %v455
        %v604 = vunpack.c.l.b16 %v456
        %v605 = vunpack.c.h.b16 %v456
        %v606 = vunpack.c.l.b16 %v457
        %v607 = vunpack.c.h.b16 %v457
        %v608 = vunpack.c.l.b16 %v458
        %v609 = vunpack.c.h.b16 %v458
        %v610 = vunpack.c.l.b16 %v459
        %v611 = vunpack.c.h.b16 %v459
        %v612 = vunpack.c.l.b16 %v460
        %v613 = vunpack.c.h.b16 %v460
        %v614 = vunpack.c.l.b16 %v461
        %v615 = vunpack.c.h.b16 %v461
        %v616 = vunpack.c.l.b16 %v462
        %v617 = vunpack.c.h.b16 %v462
        %v618 = vunpack.c.l.b16 %v463
        %v619 = vunpack.c.h.b16 %v463
        %v620 = vpack.c.b16 %v558, %v556
        %v621 = vpack.c.b16 %v559, %v557
        %v622 = vpack.c.b16 %v562, %v560
        %v623 = vpack.c.b16 %v563, %v561
        %v624 = vpack.c.b16 %v566, %v564
        %v625 = vpack.c.b16 %v567, %v565
        %v626 = vpack.c.b16 %v570, %v568
        %v627 = vpack.c.b16 %v571, %v569
        %v628 = vpack.c.b16 %v574, %v572
        %v629 = vpack.c.b16 %v575, %v573
        %v630 = vpack.c.b16 %v578, %v576
        %v631 = vpack.c.b16 %v579, %v577
        %v632 = vpack.c.b16 %v582, %v580
        %v633 = vpack.c.b16 %v583, %v581
        %v634 = vpack.c.b16 %v586, %v584
        %v635 = vpack.c.b16 %v587, %v585
        %v636 = vpack.c.b16 %v590, %v588
        %v637 = vpack.c.b16 %v591, %v589
        %v638 = vpack.c.b16 %v594, %v592
        %v639 = vpack.c.b16 %v595, %v593
        %v640 = vpack.c.b16 %v598, %v596
        %v641 = vpack.c.b16 %v599, %v597
        %v642 = vpack.c.b16 %v602, %v600
        %v643 = vpack.c.b16 %v603, %v601
        %v644 = vpack.c.b16 %v606, %v604
        %v645 = vpack.c.b16 %v607, %v605
        %v646 = vpack.c.b16 %v610, %v608
        %v647 = vpack.c.b16 %v611, %v609
        %v648 = vpack.c.b16 %v614, %v612
        %v649 = vpack.c.b16 %v615, %v613
        %v650 = vpack.c.b16 %v618, %v616
        %v651 = vpack.c.b16 %v619, %v617
        %684 = vmatprep.subr.bf16.mxu0 %v621
        %685 = vmatpush1.bf16.msra.mxu0 %v620
        %686 = vmatprep.subr.bf16.mxu0 %v623
        %687 = vmatpush1.bf16.msra.mxu0 %v622
        %688 = vmatprep.subr.bf16.mxu0 %v625
        %689 = vmatpush1.bf16.msra.mxu0 %v624
        %690 = vmatprep.subr.bf16.mxu0 %v627
        %691 = vmatpush1.bf16.msra.mxu0 %v626
        %692 = vmatprep.subr.bf16.mxu0 %v629
        %693 = vmatpush1.bf16.msra.mxu0 %v628
        %694 = vmatprep.subr.bf16.mxu0 %v631
        %695 = vmatpush1.bf16.msra.mxu0 %v630
        %696 = vmatprep.subr.bf16.mxu0 %v633
        %697 = vmatpush1.bf16.msra.mxu0 %v632
        %698 = vmatprep.subr.bf16.mxu0 %v635
        %699 = vmatpush1.bf16.msra.mxu0 %v634
        %700 = vmatprep.subr.bf16.mxu0 %v637
        %701 = vmatpush1.bf16.msra.mxu0 %v636
        %702 = vmatprep.subr.bf16.mxu0 %v639
        %703 = vmatpush1.bf16.msra.mxu0 %v638
        %704 = vmatprep.subr.bf16.mxu0 %v641
        %705 = vmatpush1.bf16.msra.mxu0 %v640
        %706 = vmatprep.subr.bf16.mxu0 %v643
        %707 = vmatpush1.bf16.msra.mxu0 %v642
        %708 = vmatprep.subr.bf16.mxu0 %v645
        %709 = vmatpush1.bf16.msra.mxu0 %v644
        %710 = vmatprep.subr.bf16.mxu0 %v647
        %711 = vmatpush1.bf16.msra.mxu0 %v646
        %712 = vmatprep.subr.bf16.mxu0 %v649
        %713 = vmatpush1.bf16.msra.mxu0 %v648
        %714 = vmatprep.subr.bf16.mxu0 %v651
        %715 = vmatpush1.bf16.msra.mxu0 %v650
        %716 = vmatprep.mubr.bf16.mxu0 %v501
        %717 = vmatmul.mubr.bf16.gmra.mrb[0].mxu0 %v500
        %v718 = vpop.f32.mrb[0].mxu0
        %v719 = vadd.f32 0.0, %v718
        %v720 = vpop.f32.mrb[0].mxu0
        %v721 = vadd.f32 0.0, %v720
        %v722 = vpop.f32.mrb[0].mxu0
        %v723 = vadd.f32 0.0, %v722
        %v724 = vpop.f32.mrb[0].mxu0
        %v725 = vadd.f32 0.0, %v724
        %726 = vmatprep.mubr.bf16.mxu0 %v503
        %727 = vmatmul.mubr.bf16.gmra.mrb[0].mxu0 %v502
        %v728 = vpop.f32.mrb[0].mxu0
        %v729 = vadd.f32 0.0, %v728
        %v730 = vpop.f32.mrb[0].mxu0
        %v731 = vadd.f32 0.0, %v730
        %v732 = vpop.f32.mrb[0].mxu0
        %v733 = vadd.f32 0.0, %v732
        %v734 = vpop.f32.mrb[0].mxu0
        %v735 = vadd.f32 0.0, %v734
        %736 = vmatprep.mubr.bf16.mxu0 %v505
        %737 = vmatmul.mubr.bf16.gmra.mrb[0].mxu0 %v504
        %v738 = vpop.f32.mrb[0].mxu0
        %v739 = vadd.f32 0.0, %v738
        %v740 = vpop.f32.mrb[0].mxu0
        %v741 = vadd.f32 0.0, %v740
        %v742 = vpop.f32.mrb[0].mxu0
        %v743 = vadd.f32 0.0, %v742
        %v744 = vpop.f32.mrb[0].mxu0
        %v745 = vadd.f32 0.0, %v744
        %746 = vmatprep.mubr.bf16.mxu0 %v507
        %747 = vmatmul.mubr.bf16.gmra.mrb[0].mxu0 %v506
        %v748 = vpop.f32.mrb[0].mxu0
        %v749 = vadd.f32 0.0, %v748
        %v750 = vpop.f32.mrb[0].mxu0
        %v751 = vadd.f32 0.0, %v750
        %v752 = vpop.f32.mrb[0].mxu0
        %v753 = vadd.f32 0.0, %v752
        %v754 = vpop.f32.mrb[0].mxu0
        %v755 = vadd.f32 0.0, %v754
        %756 = vmatprep.mubr.bf16.mxu0 %v509
        %757 = vmatmul.mubr.bf16.gmra.mrb[0].mxu0 %v508
        %v758 = vpop.f32.mrb[0].mxu0
        %v759 = vadd.f32 0.0, %v758
        %v760 = vpop.f32.mrb[0].mxu0
        %v761 = vadd.f32 0.0, %v760
        %v762 = vpop.f32.mrb[0].mxu0
        %v763 = vadd.f32 0.0, %v762
        %v764 = vpop.f32.mrb[0].mxu0
        %v765 = vadd.f32 0.0, %v764
        %766 = vmatprep.mubr.bf16.mxu0 %v511
        %767 = vmatmul.mubr.bf16.gmra.mrb[0].mxu0 %v510
        %v768 = vpop.f32.mrb[0].mxu0
        %v769 = vadd.f32 0.0, %v768
        %v770 = vpop.f32.mrb[0].mxu0
        %v771 = vadd.f32 0.0, %v770
        %v772 = vpop.f32.mrb[0].mxu0
        %v773 = vadd.f32 0.0, %v772
        %v774 = vpop.f32.mrb[0].mxu0
        %v775 = vadd.f32 0.0, %v774
        %776 = vdwg.mxu0
        %v777 = vadd.f32 %v396, %v719
        %v778 = vadd.f32 %v397, %v721
        %v779 = vadd.f32 %v398, %v723
        %v780 = vadd.f32 %v399, %v725
        %v781 = vadd.f32 %v400, %v729
        %v782 = vadd.f32 %v401, %v731
        %v783 = vadd.f32 %v402, %v733
        %v784 = vadd.f32 %v403, %v735
        %v785 = vadd.f32 %v404, %v739
        %v786 = vadd.f32 %v405, %v741
        %v787 = vadd.f32 %v406, %v743
        %v788 = vadd.f32 %v407, %v745
        %v789 = vadd.f32 %v408, %v749
        %v790 = vadd.f32 %v409, %v751
        %v791 = vadd.f32 %v410, %v753
        %v792 = vadd.f32 %v411, %v755
        %v793 = vadd.f32 %v412, %v759
        %v794 = vadd.f32 %v413, %v761
        %v795 = vadd.f32 %v414, %v763
        %v796 = vadd.f32 %v415, %v765
        %v797 = vadd.f32 %v416, %v769
        %v798 = vadd.f32 %v417, %v771
        %v799 = vadd.f32 %v418, %v773
        %v800 = vadd.f32 %v419, %v775
        %801 = vst [vmem:[#allocation2] sm:$0xff] %v777
        %802 = vst [vmem:[#allocation2 + $0x8] sm:$0xff] %v778
        %803 = vst [vmem:[#allocation2 + $0x10] sm:$0xff] %v779
        %804 = vst [vmem:[#allocation2 + $0x18] sm:$0xff] %v780
        %805 = vst [vmem:[#allocation2 + $0x20] sm:$0xff] %v781
        %806 = vst [vmem:[#allocation2 + $0x28] sm:$0xff] %v782
        %807 = vst [vmem:[#allocation2 + $0x30] sm:$0xff] %v783
        %808 = vst [vmem:[#allocation2 + $0x38] sm:$0xff] %v784
        %809 = vst [vmem:[#allocation2 + $0x40] sm:$0xff] %v785
        %810 = vst [vmem:[#allocation2 + $0x48] sm:$0xff] %v786
        %811 = vst [vmem:[#allocation2 + $0x50] sm:$0xff] %v787
        %812 = vst [vmem:[#allocation2 + $0x58] sm:$0xff] %v788
        %813 = vst [vmem:[#allocation2 + $0x60] sm:$0xff] %v789
        %814 = vst [vmem:[#allocation2 + $0x68] sm:$0xff] %v790
        %815 = vst [vmem:[#allocation2 + $0x70] sm:$0xff] %v791
        %816 = vst [vmem:[#allocation2 + $0x78] sm:$0xff] %v792
        %817 = vst [vmem:[#allocation2 + $0x80] sm:$0xff] %v793
        %818 = vst [vmem:[#allocation2 + $0x88] sm:$0xff] %v794
        %819 = vst [vmem:[#allocation2 + $0x90] sm:$0xff] %v795
        %820 = vst [vmem:[#allocation2 + $0x98] sm:$0xff] %v796
        %821 = vst [vmem:[#allocation2 + $0xa0] sm:$0xff] %v797
        %822 = vst [vmem:[#allocation2 + $0xa8] sm:$0xff] %v798
        %823 = vst [vmem:[#allocation2 + $0xb0] sm:$0xff] %v799
        %824 = vst [vmem:[#allocation2 + $0xb8] sm:$0xff] %v800
        %p825 = scmp.eq.s32.totalorder %s34, 2
        // Predicated region
        $region57: #{tpu_custom_call.1} parent=35 // pred_check
          %p826 = pneg %p825
        $region58: #{tpu_custom_call.1} parent=35 // pred_check_branch
          %828 = sbr.rel (%p826) target = $region60
        $region59: #{tpu_custom_call.1} parent=35 // pred_region
          %v829 = vld [vmem:[#allocation2] sm:$0xff]
          %v830 = vld [vmem:[#allocation2 + $0x8] sm:$0xff]
          %v831 = vld [vmem:[#allocation2 + $0x10] sm:$0xff]
          %v832 = vld [vmem:[#allocation2 + $0x18] sm:$0xff]
          %v833 = vld [vmem:[#allocation2 + $0x20] sm:$0xff]
          %v834 = vld [vmem:[#allocation2 + $0x28] sm:$0xff]
          %v835 = vld [vmem:[#allocation2 + $0x30] sm:$0xff]
          %v836 = vld [vmem:[#allocation2 + $0x38] sm:$0xff]
          %v837 = vld [vmem:[#allocation2 + $0x40] sm:$0xff]
          %v838 = vld [vmem:[#allocation2 + $0x48] sm:$0xff]
          %v839 = vld [vmem:[#allocation2 + $0x50] sm:$0xff]
          %v840 = vld [vmem:[#allocation2 + $0x58] sm:$0xff]
          %v841 = vld [vmem:[#allocation2 + $0x60] sm:$0xff]
          %v842 = vld [vmem:[#allocation2 + $0x68] sm:$0xff]
          %v843 = vld [vmem:[#allocation2 + $0x70] sm:$0xff]
          %v844 = vld [vmem:[#allocation2 + $0x78] sm:$0xff]
          %v845 = vld [vmem:[#allocation2 + $0x80] sm:$0xff]
          %v846 = vld [vmem:[#allocation2 + $0x88] sm:$0xff]
          %v847 = vld [vmem:[#allocation2 + $0x90] sm:$0xff]
          %v848 = vld [vmem:[#allocation2 + $0x98] sm:$0xff]
          %v849 = vld [vmem:[#allocation2 + $0xa0] sm:$0xff]
          %v850 = vld [vmem:[#allocation2 + $0xa8] sm:$0xff]
          %v851 = vld [vmem:[#allocation2 + $0xb0] sm:$0xff]
          %v852 = vld [vmem:[#allocation2 + $0xb8] sm:$0xff]
          %v853 = vld [vmem:[%s311] sm:$0x3]
          %v855 = vlaneseq
          %v856 = vshrl.u32 %v855, 7
          %v857 = vsub.s32 0, %v856
          %v858 = vrot.slane %v853, %v857
          %v859 = vlaneseq
          %v860 = vshrl.u32 %v859, 7
          %v861 = vsub.s32 1, %v860
          %v862 = vrot.slane %v853, %v861
          %v865 = vmul.f32 %v829, %v858
          %v866 = vmul.f32 %v830, %v862
          %v867 = vmul.f32 %v831, %v858
          %v868 = vmul.f32 %v832, %v862
          %v869 = vmul.f32 %v833, %v858
          %v870 = vmul.f32 %v834, %v862
          %v871 = vmul.f32 %v835, %v858
          %v872 = vmul.f32 %v836, %v862
          %v873 = vmul.f32 %v837, %v858
          %v874 = vmul.f32 %v838, %v862
          %v875 = vmul.f32 %v839, %v858
          %v876 = vmul.f32 %v840, %v862
          %v877 = vmul.f32 %v841, %v858
          %v878 = vmul.f32 %v842, %v862
          %v879 = vmul.f32 %v843, %v858
          %v880 = vmul.f32 %v844, %v862
          %v881 = vmul.f32 %v845, %v858
          %v882 = vmul.f32 %v846, %v862
          %v883 = vmul.f32 %v847, %v858
          %v884 = vmul.f32 %v848, %v862
          %v885 = vmul.f32 %v849, %v858
          %v886 = vmul.f32 %v850, %v862
          %v887 = vmul.f32 %v851, %v858
          %v888 = vmul.f32 %v852, %v862
          %v889 = vld [vmem:[%s320] sm:$0x3]
          %v891 = vlaneseq
          %v892 = vshrl.u32 %v891, 7
          %v893 = vsub.s32 0, %v892
          %v894 = vrot.slane %v889, %v893
          %v895 = vlaneseq
          %v896 = vshrl.u32 %v895, 7
          %v897 = vsub.s32 1, %v896
          %v898 = vrot.slane %v889, %v897
          %v901 = vadd.f32 %v865, %v894
          %v902 = vadd.f32 %v866, %v898
          %v903 = vadd.f32 %v867, %v894
          %v904 = vadd.f32 %v868, %v898
          %v905 = vadd.f32 %v869, %v894
          %v906 = vadd.f32 %v870, %v898
          %v907 = vadd.f32 %v871, %v894
          %v908 = vadd.f32 %v872, %v898
          %v909 = vadd.f32 %v873, %v894
          %v910 = vadd.f32 %v874, %v898
          %v911 = vadd.f32 %v875, %v894
          %v912 = vadd.f32 %v876, %v898
          %v913 = vadd.f32 %v877, %v894
          %v914 = vadd.f32 %v878, %v898
          %v915 = vadd.f32 %v879, %v894
          %v916 = vadd.f32 %v880, %v898
          %v917 = vadd.f32 %v881, %v894
          %v918 = vadd.f32 %v882, %v898
          %v919 = vadd.f32 %v883, %v894
          %v920 = vadd.f32 %v884, %v898
          %v921 = vadd.f32 %v885, %v894
          %v922 = vadd.f32 %v886, %v898
          %v923 = vadd.f32 %v887, %v894
          %v924 = vadd.f32 %v888, %v898
          %v925 = vpack.c.bf16 %v903, %v901
          %v926 = vpack.c.bf16 %v904, %v902
          %v927 = vpack.c.bf16 %v907, %v905
          %v928 = vpack.c.bf16 %v908, %v906
          %v929 = vpack.c.bf16 %v911, %v909
          %v930 = vpack.c.bf16 %v912, %v910
          %v931 = vpack.c.bf16 %v915, %v913
          %v932 = vpack.c.bf16 %v916, %v914
          %v933 = vpack.c.bf16 %v919, %v917
          %v934 = vpack.c.bf16 %v920, %v918
          %v935 = vpack.c.bf16 %v923, %v921
          %v936 = vpack.c.bf16 %v924, %v922
          %v949 = vunpack.c.l.b16 %v925
          %v950 = vunpack.c.l.b16 %v926
          %v951 = vunpack.c.h.b16 %v925
          %v952 = vunpack.c.h.b16 %v926
          %v953 = vunpack.c.l.b16 %v927
          %v954 = vunpack.c.l.b16 %v928
          %v955 = vunpack.c.h.b16 %v927
          %v956 = vunpack.c.h.b16 %v928
          %v957 = vunpack.c.l.b16 %v929
          %v958 = vunpack.c.l.b16 %v930
          %v959 = vunpack.c.h.b16 %v929
          %v960 = vunpack.c.h.b16 %v930
          %v961 = vunpack.c.l.b16 %v931
          %v962 = vunpack.c.l.b16 %v932
          %v963 = vunpack.c.h.b16 %v931
          %v964 = vunpack.c.h.b16 %v932
          %v965 = vunpack.c.l.b16 %v933
          %v966 = vunpack.c.l.b16 %v934
          %v967 = vunpack.c.h.b16 %v933
          %v968 = vunpack.c.h.b16 %v934
          %v969 = vunpack.c.l.b16 %v935
          %v970 = vunpack.c.l.b16 %v936
          %v971 = vunpack.c.h.b16 %v935
          %v972 = vunpack.c.h.b16 %v936
          %v973 = vpack.c.b16 %v950, %v949
          %v974 = vpack.c.b16 %v952, %v951
          %v975 = vpack.c.b16 %v954, %v953
          %v976 = vpack.c.b16 %v956, %v955
          %v977 = vpack.c.b16 %v958, %v957
          %v978 = vpack.c.b16 %v960, %v959
          %v979 = vpack.c.b16 %v962, %v961
          %v980 = vpack.c.b16 %v964, %v963
          %v981 = vpack.c.b16 %v966, %v965
          %v982 = vpack.c.b16 %v968, %v967
          %v983 = vpack.c.b16 %v970, %v969
          %v984 = vpack.c.b16 %v972, %v971
          %997 = vst [vmem:[%s359] sm:$0xff] %v973
          %998 = vst [vmem:[%s359 + $0x8] sm:$0xff] %v974
          %999 = vst [vmem:[%s359 + $0x10] sm:$0xff] %v975
          %1000 = vst [vmem:[%s359 + $0x18] sm:$0xff] %v976
          %1001 = vst [vmem:[%s359 + $0x20] sm:$0xff] %v977
          %1002 = vst [vmem:[%s359 + $0x28] sm:$0xff] %v978
          %1003 = vst [vmem:[%s359 + $0x30] sm:$0xff] %v979
          %1004 = vst [vmem:[%s359 + $0x38] sm:$0xff] %v980
          %1005 = vst [vmem:[%s359 + $0x40] sm:$0xff] %v981
          %1006 = vst [vmem:[%s359 + $0x48] sm:$0xff] %v982
          %1007 = vst [vmem:[%s359 + $0x50] sm:$0xff] %v983
          %1008 = vst [vmem:[%s359 + $0x58] sm:$0xff] %v984
        $region60: #{tpu_custom_call.1} parent=35 // pred_fallthru
          _
        %s1009 = sand.u32 %s164, 1
        %s1010 = scalar_lea.sflag [#allocation5], %s1009
        %s1011 = sand.u32 %s164, 1
        %s1012 = smul.addr %s1011, 96
        %s1013 = scalar_lea.vmem [#allocation11], %s1012
        // Predicated region
        $region61: #{tpu_custom_call.1} parent=35 // pred_check
          %p1014 = pneg %p174
        $region62: #{tpu_custom_call.1} parent=35 // pred_check_branch
          %1016 = sbr.rel (%p1014) target = $region64
        $region63: #{tpu_custom_call.1} parent=35 // pred_region
          %s1017 = smul.u32 12, %s32
          %s1018 = smul.u32 2, %s33
          %s1020 = ssub.s32 1536, 1536
          %1021 = vsyncadd %s1010, %s1020
          %s1022 = smul.addr %s1017, 6
          %s1023 = sadd.s32 %s1018, %s1022
          %s1024 = smul.addr %s1023, 64
          %s1025 = scalar_lea.hbm %s4, %s1024
          %s1026 = sshll.u32 %s1013, 4
          %s1027 = int_to_ptr.vmem [resolvable:$true] %s1026
          %1032 = dma.vmem_to_hbm [thread:$0]  %s1027, 1536, %s1025, %s1010, 128, 384, 8
        $region64: #{tpu_custom_call.1} parent=35 // pred_fallthru
          _
      $region36: #{tpu_custom_call.1} parent=5 // pred_fallthru
        _
      %p1033 = scmp.le.s32.totalorder 2, %s22
      // Predicated region
      $region65: #{tpu_custom_call.1} parent=5 // pred_check
        %p1034 = pneg %p1033
      $region66: #{tpu_custom_call.1} parent=5 // pred_check_branch
        %1036 = sbr.rel (%p1034) target = $region68
      $region67: #{tpu_custom_call.1} parent=5 // pred_region
        %s1037 = ssub.s32 %s22, 2
        // Predicated region
        $region69: #{tpu_custom_call.1} parent=67 // pred_check
          %p1038 = pneg %p180
        $region70: #{tpu_custom_call.1} parent=67 // pred_check_branch
          %1040 = sbr.rel (%p1038) target = $region72
        $region71: #{tpu_custom_call.1} parent=67 // pred_region
          %s1041 = sand.u32 %s165, 1
          %s1042 = scalar_lea.sflag [#allocation5], %s1041
          %s1043 = sand.u32 %s165, 1
          %s1044 = smul.addr %s1043, 96
          %s1045 = scalar_lea.vmem [#allocation11], %s1044
          %1046 = dma.done %s1042, 1536
        $region72: #{tpu_custom_call.1} parent=67 // pred_fallthru
          _
      $region68: #{tpu_custom_call.1} parent=5 // pred_fallthru
        _
    $region6: #{tpu_custom_call.1} parent=1 // loop_footer
      %s26 = sadd.s32 1, %s22
    $region7: #{tpu_custom_call.1} parent=1 // loop_footer_branch
      %21 = sbr.rel target = $region3
    $region8: #{tpu_custom_call.1} parent=1 // loop_exit
      _
    %1047 = vsyncpa [#allocation4], 1
    %s1048 = scalar_lea.sflag [#allocation4], 1
    %1049 = vsyncpa %s1048, 1
    %1050 = vsyncpa [#allocation7], 1
    %s1051 = scalar_lea.sflag [#allocation7], 1
    %1052 = vsyncpa %s1051, 1
    %1053 = vsyncpa [#allocation10], 1
    %s1054 = scalar_lea.sflag [#allocation10], 1
    %1055 = vsyncpa %s1054, 1
    %1056 = vsyncpa [#allocation5], 1
    %s1057 = scalar_lea.sflag [#allocation5], 1
    %1058 = vsyncpa %s1057, 1

</llo_original>
